<compile_context>
chip_gen: v7x
topology: tpu7x:2x2x1
jax: 0.10.0
libtpu: 0.0.40
codegen_flags: <defaults>
</compile_context>

<pallas_src>
import functools

import jax
import jax.numpy as jnp
from jax.experimental import pallas as pl
from jax.experimental.pallas import tpu as pltpu

_VMEM_LIMIT_BYTES = 32 * 1024 * 1024  # safe on v5e/v6e (128 MiB phys) and v7x (64 MiB)


def _round_up(x, m):
    return (x + m - 1) // m * m


# ------------------- fused kernel: conv(matmul) + BN-bias + ReLU + maxpool ---------------

def _stem_fused_kernel(p_ref, w_ref, b_ref, o_ref, ybuf, *, ho, wo, hp, wp):
    """One image: conv-as-matmul + folded-BN bias + ReLU + 3x3/s2/p1 max-pool.

    p_ref: [ho*wo, K]   bf16 im2col patches, rows in (h, w) row-major order
    w_ref: [K, Fp]      bf16 BN-folded conv weights
    b_ref: [1, Fp]      f32  BN-folded bias
    o_ref: [hp, wp, Fp] f32  pooled output
    ybuf : [2*hp+2, 2*wp+2, Fp] f32 scratch; row/col r holds conv row/col r-1 so the
           pool's padding=1 border (and any bottom/right overhang) stays zero.
    """
    fp = o_ref.shape[-1]

    # Zero the scratch: gives the pool its zero border.  Zero == -inf for the max
    # because everything stored below is post-ReLU (>= 0).
    ybuf[...] = jnp.zeros_like(ybuf)

    # conv + BN + ReLU: one MXU matmul with a fused f32 bias/ReLU epilogue.
    acc = jnp.dot(p_ref[...], w_ref[...], preferred_element_type=jnp.float32)
    act = jnp.maximum(acc + b_ref[...], 0.0)
    ybuf[1:1 + ho, 1:1 + wo, :] = act.reshape(ho, wo, fp)

    # 3x3 stride-2 max-pool: running max over 9 taps, each a static stride-2 slice in VMEM.
    out = None
    for dh in range(3):
        for dw in range(3):
            tap = ybuf[pl.ds(dh, hp, 2), pl.ds(dw, wp, 2), :]
            out = tap if out is None else jnp.maximum(out, tap)
    o_ref[...] = out


def _fused_stem_call(patches, w_mat, bias, *, ho, wo, hp, wp):
    n, m_img, k = patches.shape
    fp = w_mat.shape[1]
    kernel = functools.partial(_stem_fused_kernel, ho=ho, wo=wo, hp=hp, wp=wp)
    return pl.pallas_call(
        kernel,
        out_shape=jax.ShapeDtypeStruct((n, hp, wp, fp), jnp.float32),
        grid=(n,),
        in_specs=[
            pl.BlockSpec((None, m_img, k), lambda i: (i, 0, 0)),   # per-image patches
            pl.BlockSpec((k, fp), lambda i: (0, 0)),               # folded weights
            pl.BlockSpec((1, fp), lambda i: (0, 0)),               # folded bias
        ],
        out_specs=pl.BlockSpec((None, hp, wp, fp), lambda i: (i, 0, 0, 0)),
        scratch_shapes=[pltpu.VMEM((2 * hp + 2, 2 * wp + 2, fp), jnp.float32)],
        compiler_params=pltpu.CompilerParams(
            dimension_semantics=("parallel",),
            vmem_limit_bytes=_VMEM_LIMIT_BYTES,
        ),
    )(patches, w_mat, bias)


# ------------------------------------- forward ------------------------------------------

@functools.partial(jax.jit, static_argnames=("kernel_size", "padding", "stride", "eps"))
def input_block_forward(x_nchw, conv_w, bn_gamma, bn_beta, bn_mean, bn_var,
                        *, kernel_size, padding, stride, eps=1e-3):
    """InputBlock.forward: conv(k, s=2, p, bias=False) -> BN(eval) -> ReLU -> maxpool3x3/s2/p1."""
    ks, pad, st = kernel_size, padding, stride
    f, c, _, _ = conv_w.shape
    n, _, h, w = x_nchw.shape

    # ---- fold inference BatchNorm into the conv weight / bias ----
    scale = bn_gamma * jax.lax.rsqrt(bn_var + eps)                 # [F]
    shift = bn_beta - bn_mean * scale                              # [F]
    w_fold = conv_w * scale[:, None, None, None]                   # [F, C, kh, kw]

    k = ks * ks * c                      # K = 147 stays un-padded (full-extent block dim)
    fp = _round_up(f, 128)               # lane-dense output channels (do not pad further)
    w_mat = jnp.transpose(w_fold, (2, 3, 1, 0)).reshape(k, f)      # rows ordered (kh, kw, c)
    w_mat = jnp.pad(w_mat, ((0, 0), (0, fp - f))).astype(jnp.bfloat16)
    bias = jnp.pad(shift, (0, fp - f)).reshape(1, fp).astype(jnp.float32)

    # ---- im2col for the stem conv (wrapper-side; bounded & tiny at stem scale) ----
    x = jnp.transpose(x_nchw, (0, 2, 3, 1)).astype(jnp.bfloat16)   # NHWC, bf16 MXU operands
    xp = jnp.pad(x, ((0, 0), (pad, pad), (pad, pad), (0, 0)))
    ho = (h + 2 * pad - ks) // st + 1
    wo = (w + 2 * pad - ks) // st + 1
    taps = []
    for dh in range(ks):
        for dw in range(ks):
            taps.append(xp[:, dh:dh + (ho - 1) * st + 1:st,
                            dw:dw + (wo - 1) * st + 1:st, :])
    patches = jnp.stack(taps, axis=3).reshape(n, ho * wo, k)       # cols ordered (kh, kw, c)

    # ---- fused conv+BN+ReLU+maxpool, one pallas_call, one grid step per image ----
    hp = (ho + 2 - 3) // 2 + 1
    wp = (wo + 2 - 3) // 2 + 1
    pooled = _fused_stem_call(patches, w_mat, bias, ho=ho, wo=wo, hp=hp, wp=wp)

    return jnp.transpose(pooled[..., :f], (0, 3, 1, 2))            # drop channel pad -> NCHW


# -------------------------------- reference / params -------------------------------------

def _reference_forward(x, conv_w, g, b, m, v, eps):
    y = jax.lax.conv_general_dilated(
        x.astype(jnp.float32), conv_w, window_strides=(2, 2),
        padding=((3, 3), (3, 3)), dimension_numbers=("NCHW", "OIHW", "NCHW"))
    scale = g * jax.lax.rsqrt(v + eps)
    shift = b - m * scale
    y = jnp.maximum(y * scale[None, :, None, None] + shift[None, :, None, None], 0.0)
    return jax.lax.reduce_window(
        y, -jnp.inf, jax.lax.max,
        window_dimensions=(1, 1, 3, 3), window_strides=(1, 1, 2, 2),
        padding=((0, 0), (0, 0), (1, 1), (1, 1)))


def make_inputblock_params(num_init_features=10, kernel_size=7, in_chs=3, seed=0):
    k1, k2, k3, k4, k5 = jax.random.split(jax.random.PRNGKey(seed), 5)
    fan_in = in_chs * kernel_size * kernel_size
    return dict(
        conv_w=(jax.random.normal(
            k1, (num_init_features, in_chs, kernel_size, kernel_size), jnp.float32)
            * (1.0 / fan_in) ** 0.5),
        bn_gamma=1.0 + 0.05 * jax.random.normal(k2, (num_init_features,), jnp.float32),
        bn_beta=0.05 * jax.random.normal(k3, (num_init_features,), jnp.float32),
        bn_mean=0.05 * jax.random.normal(k4, (num_init_features,), jnp.float32),
        bn_var=1.0 + 0.1 * jnp.abs(jax.random.normal(k5, (num_init_features,), jnp.float32)),
    )


if __name__ == "__main__":
    num_init_features, kernel_size, padding, stride = 10, 7, 3, 2
    params = make_inputblock_params(num_init_features, kernel_size)
    x = jax.random.normal(jax.random.PRNGKey(0), (2, 3, 32, 32), jnp.float32)  # NCHW

    out = input_block_forward(
        x, params["conv_w"], params["bn_gamma"], params["bn_beta"],
        params["bn_mean"], params["bn_var"],
        kernel_size=kernel_size, padding=padding, stride=stride, eps=1e-3)
    out = jax.block_until_ready(out)

    assert out.shape == (2, num_init_features, 8, 8), out.shape
    assert bool(jnp.all(jnp.isfinite(out)))

    ref = _reference_forward(x, params["conv_w"], params["bn_gamma"], params["bn_beta"],
                             params["bn_mean"], params["bn_var"], 1e-3)
    # bf16 MXU operands vs f32 reference -> loose tolerance.
    assert bool(jnp.allclose(out, ref, rtol=5e-2, atol=1e-1)), \
        float(jnp.max(jnp.abs(out - ref)))
    print("KERNEL_OK")
</pallas_src>

<mosaic_0001>
module attributes {stable_mosaic.version = 11 : i64} {
  func.func @_stem_fused_kernel(%arg0: i32, %arg1: memref<1x256x147xbf16, #tpu.memory_space<vmem>>, %arg2: memref<147x128xbf16, #tpu.memory_space<vmem>>, %arg3: memref<1x128xf32, #tpu.memory_space<vmem>>, %arg4: memref<1x8x8x128xf32, #tpu.memory_space<vmem>>, %arg5: memref<18x18x128xf32, #tpu.memory_space<vmem>>) attributes {dimension_semantics = [#tpu.dimension_semantics<parallel>], iteration_bounds = array<i64: 2>, scalar_prefetch = 0 : i64, scratch_operands = 1 : i64, tpu.core_type = #tpu.core_type<tc>, window_params = [{transform_indices = @transform_0, window_bounds = array<i64: 1, 256, 147>}, {pipeline_mode = #tpu.pipeline_mode<synchronous>, transform_indices = @transform_1, window_bounds = array<i64: 147, 128>}, {pipeline_mode = #tpu.pipeline_mode<synchronous>, transform_indices = @transform_2, window_bounds = array<i64: 1, 128>}, {transform_indices = @transform_3, window_bounds = array<i64: 1, 8, 8, 128>}]} {
    %cst = arith.constant 0.000000e+00 : f32
    %0 = vector.broadcast %cst : f32 to vector<18x18x128xf32>
    %c0 = arith.constant 0 : index
    %c0_0 = arith.constant 0 : index
    %c0_1 = arith.constant 0 : index
    %1 = vector.load %arg5[%c0, %c0_0, %c0_1] : memref<18x18x128xf32, #tpu.memory_space<vmem>>, vector<18x18x128xf32>
    tpu.vector_store %arg5[%c0, %c0_0, %c0_1], %0 {strides = array<i32>} : memref<18x18x128xf32, #tpu.memory_space<vmem>>, vector<18x18x128xf32>,
    %c0_2 = arith.constant 0 : index
    %c0_3 = arith.constant 0 : index
    %c0_4 = arith.constant 0 : index
    %2 = vector.load %arg1[%c0_2, %c0_3, %c0_4] : memref<1x256x147xbf16, #tpu.memory_space<vmem>>, vector<1x256x147xbf16>
    %3 = vector.shape_cast %2 : vector<1x256x147xbf16> to vector<256x147xbf16>
    %c0_5 = arith.constant 0 : index
    %c0_6 = arith.constant 0 : index
    %4 = vector.load %arg2[%c0_5, %c0_6] : memref<147x128xbf16, #tpu.memory_space<vmem>>, vector<147x128xbf16>
    %cst_7 = arith.constant dense<0.000000e+00> : vector<256x128xf32>
    %5 = tpu.matmul %3, %4, %cst_7 {dimension_numbers = #tpu.dot_dimension_numbers<[1], [0], [0], [1], [0, 0, 1, 1], [], []>} : vector<256x147xbf16>, vector<147x128xbf16>, vector<256x128xf32> -> vector<256x128xf32>
    %c0_8 = arith.constant 0 : index
    %c0_9 = arith.constant 0 : index
    %6 = vector.load %arg3[%c0_8, %c0_9] : memref<1x128xf32, #tpu.memory_space<vmem>>, vector<1x128xf32>
    %7 = vector.broadcast %6 : vector<1x128xf32> to vector<256x128xf32>
    %8 = arith.addf %5, %7 : vector<256x128xf32>
    %cst_10 = arith.constant 0.000000e+00 : f32
    %9 = vector.broadcast %cst_10 : f32 to vector<256x128xf32>
    %10 = arith.maximumf %8, %9 : vector<256x128xf32>
    %11 = vector.shape_cast %10 : vector<256x128xf32> to vector<16x16x128xf32>
    %c1 = arith.constant 1 : index
    %c1_11 = arith.constant 1 : index
    %c0_12 = arith.constant 0 : index
    %12 = vector.load %arg5[%c1, %c1_11, %c0_12] : memref<18x18x128xf32, #tpu.memory_space<vmem>>, vector<16x16x128xf32>
    tpu.vector_store %arg5[%c1, %c1_11, %c0_12], %11 {strides = array<i32>} : memref<18x18x128xf32, #tpu.memory_space<vmem>>, vector<16x16x128xf32>,
    %c0_13 = arith.constant 0 : index
    %c0_14 = arith.constant 0 : index
    %c0_15 = arith.constant 0 : index
    %13 = tpu.strided_load %arg5[%c0_13, %c0_14, %c0_15] {strides = array<i32: 2, 2, 1>} : memref<18x18x128xf32, #tpu.memory_space<vmem>>, vector<8x8x128xf32>
    %c0_16 = arith.constant 0 : index
    %c1_17 = arith.constant 1 : index
    %c0_18 = arith.constant 0 : index
    %14 = tpu.strided_load %arg5[%c0_16, %c1_17, %c0_18] {strides = array<i32: 2, 2, 1>} : memref<18x18x128xf32, #tpu.memory_space<vmem>>, vector<8x8x128xf32>
    %15 = arith.maximumf %13, %14 : vector<8x8x128xf32>
    %c0_19 = arith.constant 0 : index
    %c2 = arith.constant 2 : index
    %c0_20 = arith.constant 0 : index
    %16 = tpu.strided_load %arg5[%c0_19, %c2, %c0_20] {strides = array<i32: 2, 2, 1>} : memref<18x18x128xf32, #tpu.memory_space<vmem>>, vector<8x8x128xf32>
    %17 = arith.maximumf %15, %16 : vector<8x8x128xf32>
    %c1_21 = arith.constant 1 : index
    %c0_22 = arith.constant 0 : index
    %c0_23 = arith.constant 0 : index
    %18 = tpu.strided_load %arg5[%c1_21, %c0_22, %c0_23] {strides = array<i32: 2, 2, 1>} : memref<18x18x128xf32, #tpu.memory_space<vmem>>, vector<8x8x128xf32>
    %19 = arith.maximumf %17, %18 : vector<8x8x128xf32>
    %c1_24 = arith.constant 1 : index
    %c1_25 = arith.constant 1 : index
    %c0_26 = arith.constant 0 : index
    %20 = tpu.strided_load %arg5[%c1_24, %c1_25, %c0_26] {strides = array<i32: 2, 2, 1>} : memref<18x18x128xf32, #tpu.memory_space<vmem>>, vector<8x8x128xf32>
    %21 = arith.maximumf %19, %20 : vector<8x8x128xf32>
    %c1_27 = arith.constant 1 : index
    %c2_28 = arith.constant 2 : index
    %c0_29 = arith.constant 0 : index
    %22 = tpu.strided_load %arg5[%c1_27, %c2_28, %c0_29] {strides = array<i32: 2, 2, 1>} : memref<18x18x128xf32, #tpu.memory_space<vmem>>, vector<8x8x128xf32>
    %23 = arith.maximumf %21, %22 : vector<8x8x128xf32>
    %c2_30 = arith.constant 2 : index
    %c0_31 = arith.constant 0 : index
    %c0_32 = arith.constant 0 : index
    %24 = tpu.strided_load %arg5[%c2_30, %c0_31, %c0_32] {strides = array<i32: 2, 2, 1>} : memref<18x18x128xf32, #tpu.memory_space<vmem>>, vector<8x8x128xf32>
    %25 = arith.maximumf %23, %24 : vector<8x8x128xf32>
    %c2_33 = arith.constant 2 : index
    %c1_34 = arith.constant 1 : index
    %c0_35 = arith.constant 0 : index
    %26 = tpu.strided_load %arg5[%c2_33, %c1_34, %c0_35] {strides = array<i32: 2, 2, 1>} : memref<18x18x128xf32, #tpu.memory_space<vmem>>, vector<8x8x128xf32>
    %27 = arith.maximumf %25, %26 : vector<8x8x128xf32>
    %c2_36 = arith.constant 2 : index
    %c2_37 = arith.constant 2 : index
    %c0_38 = arith.constant 0 : index
    %28 = tpu.strided_load %arg5[%c2_36, %c2_37, %c0_38] {strides = array<i32: 2, 2, 1>} : memref<18x18x128xf32, #tpu.memory_space<vmem>>, vector<8x8x128xf32>
    %29 = arith.maximumf %27, %28 : vector<8x8x128xf32>
    %c0_39 = arith.constant 0 : index
    %c0_40 = arith.constant 0 : index
    %c0_41 = arith.constant 0 : index
    %c0_42 = arith.constant 0 : index
    %30 = vector.load %arg4[%c0_39, %c0_40, %c0_41, %c0_42] : memref<1x8x8x128xf32, #tpu.memory_space<vmem>>, vector<1x8x8x128xf32>
    %31 = vector.shape_cast %30 : vector<1x8x8x128xf32> to vector<8x8x128xf32>
    %32 = vector.shape_cast %29 : vector<8x8x128xf32> to vector<1x8x8x128xf32>
    tpu.vector_store %arg4[%c0_39, %c0_40, %c0_41, %c0_42], %32 {strides = array<i32>} : memref<1x8x8x128xf32, #tpu.memory_space<vmem>>, vector<1x8x8x128xf32>,
    return
  }
  func.func @transform_0(%arg0: i32) -> (i32, i32, i32) {
    %c0_i32 = arith.constant 0 : i32
    %c0_i32_0 = arith.constant 0 : i32
    %c0_i32_1 = arith.constant 0 : i32
    return %arg0, %c0_i32, %c0_i32_0 : i32, i32, i32
  }
  func.func @transform_1(%arg0: i32) -> (i32, i32) {
    %c0_i32 = arith.constant 0 : i32
    %c0_i32_0 = arith.constant 0 : i32
    %c0_i32_1 = arith.constant 0 : i32
    return %c0_i32, %c0_i32_0 : i32, i32
  }
  func.func @transform_2(%arg0: i32) -> (i32, i32) {
    %c0_i32 = arith.constant 0 : i32
    %c0_i32_0 = arith.constant 0 : i32
    %c0_i32_1 = arith.constant 0 : i32
    return %c0_i32, %c0_i32_0 : i32, i32
  }
  func.func @transform_3(%arg0: i32) -> (i32, i32, i32, i32) {
    %c0_i32 = arith.constant 0 : i32
    %c0_i32_0 = arith.constant 0 : i32
    %c0_i32_1 = arith.constant 0 : i32
    %c0_i32_2 = arith.constant 0 : i32
    return %arg0, %c0_i32, %c0_i32_0, %c0_i32_1 : i32, i32, i32, i32
  }
}

</mosaic_0001>

<llo_original>
// kernel: input_block_forward.1
$region0: #{input_block_forward.1}
  #allocation0 [shape = 'u32[]', space=smem, size = 0x4, offset = 0x4, fixed_abs, tag = 'smem constant byte address 0x4 - core index']
  #allocation1 [shape = 'u32[144,128]{1,0:T(1,128)}', space=vmem, size = 0x12000, scoped, tag = 'internal scratch']
  #allocation2 [shape = 'f32[18,18,128]{2,1,0:T(8,128)}', space=vmem, size = 0x36000, scoped, tag = 'scratch operand']
  %s0 = inlined_call_operand.vmem [shape: bf16[2,256,147], index: 0, kind: input, shape index: {}]
  %s1 = inlined_call_operand.vmem [shape: bf16[147,128], index: 1, kind: input, shape index: {}]
  %s2 = inlined_call_operand.vmem [shape: f32[1,128], index: 2, kind: input, shape index: {}]
  %s3 = inlined_call_operand.vmem [shape: f32[2,8,8,128], index: 3, kind: output, shape index: {}]
  %s4 = sld [smem:[#allocation0]]
  $region45: #{input_block_forward.1} parent=0
    _
  %s6 = ssub.s32 1, %s4
  %s7 = scalar_select 0, %s6, %s4
  loop: start=0, step=1, limit=4
  $region2: #{input_block_forward.1} parent=0 // loop_pre_header
    _
  $region3: #{input_block_forward.1} parent=0 // loop_header
    %s9 = sphi 0, %s13
    %p10 = scmp.ge.s32.totalorder %s9, 4
    %s19 = sphi 0, %s21
    %s22 = sphi 0, %s19
    %s23 = sphi 0, %s22
    %s39 = sphi 0, %s23
    %s43 = sphi 0, %s43
    %s45 = sphi 0, %s43
    %s46 = sphi 0, %s45
    %s60 = sphi 0, %s46
    %s64 = sphi 0, %s64
    %s66 = sphi 0, %s64
    %s67 = sphi 0, %s66
    %s81 = sphi 0, %s67
    %s87 = sphi 0, %s89
    %s90 = sphi 0, %s87
    %s91 = sphi 0, %s90
    %s107 = sphi 0, %s91
  $region4: #{input_block_forward.1} parent=0 // loop_header_branch
    %12 = sbr.rel (%p10) target = $region8
  $region5: #{input_block_forward.1} parent=0 // loop_body
    %s14 = ssub.s32 %s9, 1
    %s15 = ssub.s32 %s9, 2
    %s16 = sadd.s32 %s9, 1
    %s17 = ssub.s32 %s9, %s16
    %p18 = scmp.eq.s32.totalorder %s17, 0
    %s20 = sadd.s32 %s19, 1
    %s21 = scalar_select %p18, %s19, %s20
    %p24 = pneg %p18
    %p25 = scmp.eq.s32.totalorder %s9, 1
    %p26 = por %p24, %p25
    %p27 = scmp.ne.s32.totalorder %s19, %s22
    %p28 = scmp.eq.s32.totalorder %s9, 0
    %p29 = por %p27, %p28
    %p30 = scmp.ne.s32.totalorder %s19, %s22
    %p31 = scmp.eq.s32.totalorder %s14, 1
    %p32 = por %p30, %p31
    %p33 = scmp.ne.s32.totalorder %s22, %s23
    %p34 = scmp.eq.s32.totalorder %s14, 0
    %p35 = por %p33, %p34
    %p36 = scmp.ne.s32.totalorder %s22, %s23
    %p37 = scmp.eq.s32.totalorder %s15, 1
    %p38 = por %p36, %p37
    %p40 = scmp.ne.s32.totalorder %s23, %s39
    %p41 = scmp.eq.s32.totalorder %s15, 0
    %p42 = por %p40, %p41
    %s44 = sadd.s32 %s43, 1
    %p47 = scmp.eq.s32.totalorder %s9, 1
    %p48 = scmp.ne.s32.totalorder %s43, %s45
    %p49 = scmp.eq.s32.totalorder %s9, 0
    %p50 = por %p48, %p49
    %p51 = scmp.ne.s32.totalorder %s43, %s45
    %p52 = scmp.eq.s32.totalorder %s14, 1
    %p53 = por %p51, %p52
    %p54 = scmp.ne.s32.totalorder %s45, %s46
    %p55 = scmp.eq.s32.totalorder %s14, 0
    %p56 = por %p54, %p55
    %p57 = scmp.ne.s32.totalorder %s45, %s46
    %p58 = scmp.eq.s32.totalorder %s15, 1
    %p59 = por %p57, %p58
    %p61 = scmp.ne.s32.totalorder %s46, %s60
    %p62 = scmp.eq.s32.totalorder %s15, 0
    %p63 = por %p61, %p62
    %s65 = sadd.s32 %s64, 1
    %p68 = scmp.eq.s32.totalorder %s9, 1
    %p69 = scmp.ne.s32.totalorder %s64, %s66
    %p70 = scmp.eq.s32.totalorder %s9, 0
    %p71 = por %p69, %p70
    %p72 = scmp.ne.s32.totalorder %s64, %s66
    %p73 = scmp.eq.s32.totalorder %s14, 1
    %p74 = por %p72, %p73
    %p75 = scmp.ne.s32.totalorder %s66, %s67
    %p76 = scmp.eq.s32.totalorder %s14, 0
    %p77 = por %p75, %p76
    %p78 = scmp.ne.s32.totalorder %s66, %s67
    %p79 = scmp.eq.s32.totalorder %s15, 1
    %p80 = por %p78, %p79
    %p82 = scmp.ne.s32.totalorder %s67, %s81
    %p83 = scmp.eq.s32.totalorder %s15, 0
    %p84 = por %p82, %p83
    %s85 = ssub.s32 %s9, %s16
    %p86 = scmp.eq.s32.totalorder %s85, 0
    %s88 = sadd.s32 %s87, 1
    %s89 = scalar_select %p86, %s87, %s88
    %p92 = pneg %p86
    %p93 = scmp.eq.s32.totalorder %s9, 1
    %p94 = por %p92, %p93
    %p95 = scmp.ne.s32.totalorder %s87, %s90
    %p96 = scmp.eq.s32.totalorder %s9, 0
    %p97 = por %p95, %p96
    %p98 = scmp.ne.s32.totalorder %s87, %s90
    %p99 = scmp.eq.s32.totalorder %s14, 1
    %p100 = por %p98, %p99
    %p101 = scmp.ne.s32.totalorder %s90, %s91
    %p102 = scmp.eq.s32.totalorder %s14, 0
    %p103 = por %p101, %p102
    %p104 = scmp.ne.s32.totalorder %s90, %s91
    %p105 = scmp.eq.s32.totalorder %s15, 1
    %p106 = por %p104, %p105
    %p108 = scmp.ne.s32.totalorder %s91, %s107
    %p109 = scmp.eq.s32.totalorder %s15, 0
    %p110 = por %p108, %p109
    %p111 = scmp.le.s32.totalorder 1, %s9
    %p112 = scmp.lt.s32.totalorder %s9, 3
    %p113 = pnand %p111, %p112
    %p114 = pneg %p113
    // Predicated region
    $region9: #{input_block_forward.1} parent=5 // pred_check
      _
    $region10: #{input_block_forward.1} parent=5 // pred_check_branch
      %116 = sbr.rel (%p113) target = $region12
    $region11: #{input_block_forward.1} parent=5 // pred_region
      %s117 = ssub.s32 %s9, 1
      // Predicated region
      $region13: #{input_block_forward.1} parent=11 // pred_check
        %p118 = pneg %p56
      $region14: #{input_block_forward.1} parent=11 // pred_check_branch
        %120 = sbr.rel (%p118) target = $region16
      $region15: #{input_block_forward.1} parent=11 // pred_region
        _
      $region16: #{input_block_forward.1} parent=11 // pred_fallthru
        _
      // Predicated region
      $region17: #{input_block_forward.1} parent=11 // pred_check
        %p121 = pneg %p77
      $region18: #{input_block_forward.1} parent=11 // pred_check_branch
        %123 = sbr.rel (%p121) target = $region20
      $region19: #{input_block_forward.1} parent=11 // pred_region
        _
      $region20: #{input_block_forward.1} parent=11 // pred_fallthru
        _
    $region12: #{input_block_forward.1} parent=5 // pred_fallthru
      _
    %p124 = scmp.lt.s32.totalorder %s9, 2
    // Predicated region
    $region21: #{input_block_forward.1} parent=5 // pred_check
      %p125 = pneg %p124
    $region22: #{input_block_forward.1} parent=5 // pred_check_branch
      %127 = sbr.rel (%p125) target = $region24
    $region23: #{input_block_forward.1} parent=5 // pred_region
      // Predicated region
      $region25: #{input_block_forward.1} parent=23 // pred_check
        %p128 = pneg %p29
      $region26: #{input_block_forward.1} parent=23 // pred_check_branch
        %130 = sbr.rel (%p128) target = $region28
      $region27: #{input_block_forward.1} parent=23 // pred_region
        %p131 = scmp.lt.s32.totalorder %s9, 1
        %s132 = scalar_select %p131, %s9, 1
        %s133 = smul.addr %s132, 64
        %s134 = smul.addr %s133, 4
        %s135 = scalar_lea.vmem %s0, %s134
      $region28: #{input_block_forward.1} parent=23 // pred_fallthru
        _
    $region24: #{input_block_forward.1} parent=5 // pred_fallthru
      _
    %p136 = scmp.le.s32.totalorder 1, %s9
    %p137 = scmp.lt.s32.totalorder %s9, 3
    %p138 = pnand %p136, %p137
    %p139 = pneg %p138
    // Predicated region
    $region29: #{input_block_forward.1} parent=5 // pred_check
      _
    $region30: #{input_block_forward.1} parent=5 // pred_check_branch
      %141 = sbr.rel (%p138) target = $region32
    $region31: #{input_block_forward.1} parent=5 // pred_region
      %s142 = ssub.s32 %s9, 1
      %p143 = scmp.lt.s32.totalorder %s14, 1
      %s144 = scalar_select %p143, %s14, 1
      %s145 = smul.addr %s144, 64
      %s146 = smul.addr %s145, 4
      %s147 = scalar_lea.vmem %s0, %s146
      %p148 = pneg %p35
      %p149 = pneg %p32
      %p150 = pneg %p56
      %p151 = pneg %p53
      %p152 = pneg %p77
      %p153 = pneg %p74
      %p154 = pneg %p103
      %p155 = pneg %p100
      %p156 = scmp.lt.s32.totalorder %s14, 1
      %s157 = scalar_select %p156, %s14, 1
      %s158 = smul.addr %s157, 8
      %s159 = smul.addr %s158, 8
      %s160 = scalar_lea.vmem %s3, %s159
      %p161 = scmp.lt.s32.totalorder %s14, 1
      %s162 = scalar_select %p161, %s14, 1
      %s163 = smul.addr %s162, 64
      %s164 = smul.addr %s163, 4
      %s165 = scalar_lea.vmem %s0, %s164
      %p166 = scmp.lt.s32.totalorder %s14, 1
      %s167 = scalar_select %p166, %s14, 1
      %s168 = smul.addr %s167, 8
      %s169 = smul.addr %s168, 8
      %s170 = scalar_lea.vmem %s3, %s169
      %172 = vst [vmem:[#allocation2] sm:$0xff] 0.0
      %173 = vst [vmem:[#allocation2 + $0x8] sm:$0xff] 0.0
      %174 = vst [vmem:[#allocation2 + $0x10] sm:$0x3] 0.0
      %175 = vst [vmem:[#allocation2 + $0x18] sm:$0xff] 0.0
      %176 = vst [vmem:[#allocation2 + $0x20] sm:$0xff] 0.0
      %177 = vst [vmem:[#allocation2 + $0x28] sm:$0x3] 0.0
      %178 = vst [vmem:[#allocation2 + $0x30] sm:$0xff] 0.0
      %179 = vst [vmem:[#allocation2 + $0x38] sm:$0xff] 0.0
      %180 = vst [vmem:[#allocation2 + $0x40] sm:$0x3] 0.0
      %181 = vst [vmem:[#allocation2 + $0x48] sm:$0xff] 0.0
      %182 = vst [vmem:[#allocation2 + $0x50] sm:$0xff] 0.0
      %183 = vst [vmem:[#allocation2 + $0x58] sm:$0x3] 0.0
      %184 = vst [vmem:[#allocation2 + $0x60] sm:$0xff] 0.0
      %185 = vst [vmem:[#allocation2 + $0x68] sm:$0xff] 0.0
      %186 = vst [vmem:[#allocation2 + $0x70] sm:$0x3] 0.0
      %187 = vst [vmem:[#allocation2 + $0x78] sm:$0xff] 0.0
      %188 = vst [vmem:[#allocation2 + $0x80] sm:$0xff] 0.0
      %189 = vst [vmem:[#allocation2 + $0x88] sm:$0x3] 0.0
      %190 = vst [vmem:[#allocation2 + $0x90] sm:$0xff] 0.0
      %191 = vst [vmem:[#allocation2 + $0x98] sm:$0xff] 0.0
      %192 = vst [vmem:[#allocation2 + $0xa0] sm:$0x3] 0.0
      %193 = vst [vmem:[#allocation2 + $0xa8] sm:$0xff] 0.0
      %194 = vst [vmem:[#allocation2 + $0xb0] sm:$0xff] 0.0
      %195 = vst [vmem:[#allocation2 + $0xb8] sm:$0x3] 0.0
      %196 = vst [vmem:[#allocation2 + $0xc0] sm:$0xff] 0.0
      %197 = vst [vmem:[#allocation2 + $0xc8] sm:$0xff] 0.0
      %198 = vst [vmem:[#allocation2 + $0xd0] sm:$0x3] 0.0
      %199 = vst [vmem:[#allocation2 + $0xd8] sm:$0xff] 0.0
      %200 = vst [vmem:[#allocation2 + $0xe0] sm:$0xff] 0.0
      %201 = vst [vmem:[#allocation2 + $0xe8] sm:$0x3] 0.0
      %202 = vst [vmem:[#allocation2 + $0xf0] sm:$0xff] 0.0
      %203 = vst [vmem:[#allocation2 + $0xf8] sm:$0xff] 0.0
      %204 = vst [vmem:[#allocation2 + $0x100] sm:$0x3] 0.0
      %205 = vst [vmem:[#allocation2 + $0x108] sm:$0xff] 0.0
      %206 = vst [vmem:[#allocation2 + $0x110] sm:$0xff] 0.0
      %207 = vst [vmem:[#allocation2 + $0x118] sm:$0x3] 0.0
      %208 = vst [vmem:[#allocation2 + $0x120] sm:$0xff] 0.0
      %209 = vst [vmem:[#allocation2 + $0x128] sm:$0xff] 0.0
      %210 = vst [vmem:[#allocation2 + $0x130] sm:$0x3] 0.0
      %211 = vst [vmem:[#allocation2 + $0x138] sm:$0xff] 0.0
      %212 = vst [vmem:[#allocation2 + $0x140] sm:$0xff] 0.0
      %213 = vst [vmem:[#allocation2 + $0x148] sm:$0x3] 0.0
      %214 = vst [vmem:[#allocation2 + $0x150] sm:$0xff] 0.0
      %215 = vst [vmem:[#allocation2 + $0x158] sm:$0xff] 0.0
      %216 = vst [vmem:[#allocation2 + $0x160] sm:$0x3] 0.0
      %217 = vst [vmem:[#allocation2 + $0x168] sm:$0xff] 0.0
      %218 = vst [vmem:[#allocation2 + $0x170] sm:$0xff] 0.0
      %219 = vst [vmem:[#allocation2 + $0x178] sm:$0x3] 0.0
      %220 = vst [vmem:[#allocation2 + $0x180] sm:$0xff] 0.0
      %221 = vst [vmem:[#allocation2 + $0x188] sm:$0xff] 0.0
      %222 = vst [vmem:[#allocation2 + $0x190] sm:$0x3] 0.0
      %223 = vst [vmem:[#allocation2 + $0x198] sm:$0xff] 0.0
      %224 = vst [vmem:[#allocation2 + $0x1a0] sm:$0xff] 0.0
      %225 = vst [vmem:[#allocation2 + $0x1a8] sm:$0x3] 0.0
      %v226 = vld [vmem:[%s165] sm:$0xff]
      %v227 = vld [vmem:[%s165 + $0x8] sm:$0xff]
      %v228 = vld [vmem:[%s165 + $0x10] sm:$0xff]
      %v229 = vld [vmem:[%s165 + $0x18] sm:$0xff]
      %v230 = vld [vmem:[%s165 + $0x20] sm:$0xff]
      %v231 = vld [vmem:[%s165 + $0x28] sm:$0xff]
      %v232 = vld [vmem:[%s165 + $0x30] sm:$0xff]
      %v233 = vld [vmem:[%s165 + $0x38] sm:$0xff]
      %v234 = vld [vmem:[%s165 + $0x40] sm:$0xff]
      %v235 = vld [vmem:[%s165 + $0x48] sm:$0xff]
      %v236 = vld [vmem:[%s165 + $0x50] sm:$0xff]
      %v237 = vld [vmem:[%s165 + $0x58] sm:$0xff]
      %v238 = vld [vmem:[%s165 + $0x60] sm:$0xff]
      %v239 = vld [vmem:[%s165 + $0x68] sm:$0xff]
      %v240 = vld [vmem:[%s165 + $0x70] sm:$0xff]
      %v241 = vld [vmem:[%s165 + $0x78] sm:$0xff]
      %v242 = vld [vmem:[%s165 + $0x80] sm:$0xff]
      %v243 = vld [vmem:[%s165 + $0x88] sm:$0xff]
      %v244 = vld [vmem:[%s165 + $0x90] sm:$0xff]
      %v245 = vld [vmem:[%s165 + $0x98] sm:$0xff]
      %v246 = vld [vmem:[%s165 + $0xa0] sm:$0xff]
      %v247 = vld [vmem:[%s165 + $0xa8] sm:$0xff]
      %v248 = vld [vmem:[%s165 + $0xb0] sm:$0xff]
      %v249 = vld [vmem:[%s165 + $0xb8] sm:$0xff]
      %v250 = vld [vmem:[%s165 + $0xc0] sm:$0xff]
      %v251 = vld [vmem:[%s165 + $0xc8] sm:$0xff]
      %v252 = vld [vmem:[%s165 + $0xd0] sm:$0xff]
      %v253 = vld [vmem:[%s165 + $0xd8] sm:$0xff]
      %v254 = vld [vmem:[%s165 + $0xe0] sm:$0xff]
      %v255 = vld [vmem:[%s165 + $0xe8] sm:$0xff]
      %v256 = vld [vmem:[%s165 + $0xf0] sm:$0xff]
      %v257 = vld [vmem:[%s165 + $0xf8] sm:$0xff]
      %v258 = vld [vmem:[%s1] sm:$0xf]
      %v259 = vld [vmem:[%s1 + $0x4] sm:$0xf]
      %v260 = vld [vmem:[%s1 + $0x8] sm:$0xf]
      %v261 = vld [vmem:[%s1 + $0xc] sm:$0xf]
      %v262 = vld [vmem:[%s1 + $0x10] sm:$0xf]
      %v263 = vld [vmem:[%s1 + $0x14] sm:$0xf]
      %v264 = vld [vmem:[%s1 + $0x18] sm:$0xf]
      %v265 = vld [vmem:[%s1 + $0x1c] sm:$0xf]
      %v266 = vld [vmem:[%s1 + $0x20] sm:$0xf]
      %v267 = vld [vmem:[%s1 + $0x24] sm:$0xf]
      %v268 = vld [vmem:[%s1 + $0x28] sm:$0xf]
      %v269 = vld [vmem:[%s1 + $0x2c] sm:$0xf]
      %v270 = vld [vmem:[%s1 + $0x30] sm:$0xf]
      %v271 = vld [vmem:[%s1 + $0x34] sm:$0xf]
      %v272 = vld [vmem:[%s1 + $0x38] sm:$0xf]
      %v273 = vld [vmem:[%s1 + $0x3c] sm:$0xf]
      %v274 = vld [vmem:[%s1 + $0x40] sm:$0xf]
      %v275 = vld [vmem:[%s1 + $0x44] sm:$0xf]
      %v276 = vld [vmem:[%s1 + $0x48] sm:$0x3]
      %v277 = vld [vmem:[%s2] sm:$0x1]
      %v279 = vlaneseq
      %v280 = vshrl.u32 %v279, 7
      %v281 = vsub.s32 0, %v280
      %v282 = vrot.slane %v277, %v281
      %v316 = vunpack.c.l.b16 %v226
      %v317 = vunpack.c.h.b16 %v226
      %v318 = vunpack.c.l.b16 %v227
      %v319 = vunpack.c.h.b16 %v227
      %v320 = vunpack.c.l.b16 %v228
      %v321 = vunpack.c.h.b16 %v228
      %v322 = vunpack.c.l.b16 %v229
      %v323 = vunpack.c.h.b16 %v229
      %v324 = vunpack.c.l.b16 %v230
      %v325 = vunpack.c.h.b16 %v230
      %v326 = vunpack.c.l.b16 %v231
      %v327 = vunpack.c.h.b16 %v231
      %v328 = vunpack.c.l.b16 %v232
      %v329 = vunpack.c.h.b16 %v232
      %v330 = vunpack.c.l.b16 %v233
      %v331 = vunpack.c.h.b16 %v233
      %v332 = vunpack.c.l.b16 %v234
      %v333 = vunpack.c.h.b16 %v234
      %v334 = vunpack.c.l.b16 %v235
      %v335 = vunpack.c.h.b16 %v235
      %v336 = vunpack.c.l.b16 %v236
      %v337 = vunpack.c.h.b16 %v236
      %v338 = vunpack.c.l.b16 %v237
      %v339 = vunpack.c.h.b16 %v237
      %v340 = vunpack.c.l.b16 %v238
      %v341 = vunpack.c.h.b16 %v238
      %v342 = vunpack.c.l.b16 %v239
      %v343 = vunpack.c.h.b16 %v239
      %v344 = vunpack.c.l.b16 %v240
      %v345 = vunpack.c.h.b16 %v240
      %v346 = vunpack.c.l.b16 %v241
      %v347 = vunpack.c.h.b16 %v241
      %v348 = vunpack.c.l.b16 %v242
      %v349 = vunpack.c.h.b16 %v242
      %v350 = vunpack.c.l.b16 %v243
      %v351 = vunpack.c.h.b16 %v243
      %v352 = vunpack.c.l.b16 %v244
      %v353 = vunpack.c.h.b16 %v244
      %v354 = vunpack.c.l.b16 %v245
      %v355 = vunpack.c.h.b16 %v245
      %v356 = vunpack.c.l.b16 %v246
      %v357 = vunpack.c.h.b16 %v246
      %v358 = vunpack.c.l.b16 %v247
      %v359 = vunpack.c.h.b16 %v247
      %v360 = vunpack.c.l.b16 %v248
      %v361 = vunpack.c.h.b16 %v248
      %v362 = vunpack.c.l.b16 %v249
      %v363 = vunpack.c.h.b16 %v249
      %v364 = vunpack.c.l.b16 %v250
      %v365 = vunpack.c.h.b16 %v250
      %v366 = vunpack.c.l.b16 %v251
      %v367 = vunpack.c.h.b16 %v251
      %v368 = vunpack.c.l.b16 %v252
      %v369 = vunpack.c.h.b16 %v252
      %v370 = vunpack.c.l.b16 %v253
      %v371 = vunpack.c.h.b16 %v253
      %v372 = vunpack.c.l.b16 %v254
      %v373 = vunpack.c.h.b16 %v254
      %v374 = vunpack.c.l.b16 %v255
      %v375 = vunpack.c.h.b16 %v255
      %v376 = vunpack.c.l.b16 %v256
      %v377 = vunpack.c.h.b16 %v256
      %v378 = vunpack.c.l.b16 %v257
      %v379 = vunpack.c.h.b16 %v257
      %v380 = vpack.c.b16 %v318, %v316
      %v381 = vpack.c.b16 %v319, %v317
      %v382 = vpack.c.b16 %v322, %v320
      %v383 = vpack.c.b16 %v323, %v321
      %v384 = vpack.c.b16 %v326, %v324
      %v385 = vpack.c.b16 %v327, %v325
      %v386 = vpack.c.b16 %v330, %v328
      %v387 = vpack.c.b16 %v331, %v329
      %v388 = vpack.c.b16 %v334, %v332
      %v389 = vpack.c.b16 %v335, %v333
      %v390 = vpack.c.b16 %v338, %v336
      %v391 = vpack.c.b16 %v339, %v337
      %v392 = vpack.c.b16 %v342, %v340
      %v393 = vpack.c.b16 %v343, %v341
      %v394 = vpack.c.b16 %v346, %v344
      %v395 = vpack.c.b16 %v347, %v345
      %v396 = vpack.c.b16 %v350, %v348
      %v397 = vpack.c.b16 %v351, %v349
      %v398 = vpack.c.b16 %v354, %v352
      %v399 = vpack.c.b16 %v355, %v353
      %v400 = vpack.c.b16 %v358, %v356
      %v401 = vpack.c.b16 %v359, %v357
      %v402 = vpack.c.b16 %v362, %v360
      %v403 = vpack.c.b16 %v363, %v361
      %v404 = vpack.c.b16 %v366, %v364
      %v405 = vpack.c.b16 %v367, %v365
      %v406 = vpack.c.b16 %v370, %v368
      %v407 = vpack.c.b16 %v371, %v369
      %v408 = vpack.c.b16 %v374, %v372
      %v409 = vpack.c.b16 %v375, %v373
      %v410 = vpack.c.b16 %v378, %v376
      %v411 = vpack.c.b16 %v379, %v377
      %v447 = vunpack.c.l.b16 %v258
      %v448 = vunpack.c.l.b16 %v259
      %v449 = vunpack.c.l.b16 %v260
      %v450 = vunpack.c.l.b16 %v261
      %v451 = vunpack.c.l.b16 %v262
      %v452 = vunpack.c.l.b16 %v263
      %v453 = vunpack.c.l.b16 %v264
      %v454 = vunpack.c.l.b16 %v265
      %v455 = vunpack.c.l.b16 %v266
      %v456 = vunpack.c.l.b16 %v267
      %v457 = vunpack.c.l.b16 %v268
      %v458 = vunpack.c.l.b16 %v269
      %v459 = vunpack.c.l.b16 %v270
      %v460 = vunpack.c.l.b16 %v271
      %v461 = vunpack.c.l.b16 %v272
      %v462 = vunpack.c.l.b16 %v273
      %v463 = vunpack.c.l.b16 %v274
      %v464 = vunpack.c.l.b16 %v275
      %v465 = vunpack.c.l.b16 %v276
      %v466 = vpack.c.b16 %v448, %v447
      %v467 = vpack.c.b16 %v450, %v449
      %v468 = vpack.c.b16 %v452, %v451
      %v469 = vpack.c.b16 %v454, %v453
      %v470 = vpack.c.b16 %v456, %v455
      %v471 = vpack.c.b16 %v458, %v457
      %v472 = vpack.c.b16 %v460, %v459
      %v473 = vpack.c.b16 %v462, %v461
      %v474 = vpack.c.b16 %v464, %v463
      %v475 = vpack.c.b16 %v465, %v465
      %vm485 = vcmask 154624
      %v487 = vsel %vm485, %v381, 0
      %v490 = vsel %vm485, %v383, 0
      %v493 = vsel %vm485, %v385, 0
      %v496 = vsel %vm485, %v387, 0
      %v499 = vsel %vm485, %v389, 0
      %v502 = vsel %vm485, %v391, 0
      %v505 = vsel %vm485, %v393, 0
      %v508 = vsel %vm485, %v395, 0
      %v511 = vsel %vm485, %v397, 0
      %v514 = vsel %vm485, %v399, 0
      %v517 = vsel %vm485, %v401, 0
      %v520 = vsel %vm485, %v403, 0
      %v523 = vsel %vm485, %v405, 0
      %v526 = vsel %vm485, %v407, 0
      %v529 = vsel %vm485, %v409, 0
      %v532 = vsel %vm485, %v411, 0
      %vm534 = vcmask 1040384
      %vm535 = vcmask 1041408
      %v536 = vsel %vm534, 4294967295, 65535
      %v537 = vsel %vm535, %v536, 0
      %v539 = vand.u32 %v475, %v537
      %541 = vmatprep.subr.bf16.mxu0 0
      %542 = vmatpush1.bf16.msra.mxu0 %v466
      %543 = vmatprep.subr.bf16.mxu0 0
      %544 = vmatpush1.bf16.msra.mxu0 %v467
      %545 = vmatprep.subr.bf16.mxu0 0
      %546 = vmatpush1.bf16.msra.mxu0 %v468
      %547 = vmatprep.subr.bf16.mxu0 0
      %548 = vmatpush1.bf16.msra.mxu0 %v469
      %549 = vmatprep.subr.bf16.mxu0 0
      %550 = vmatpush1.bf16.msra.mxu0 %v470
      %551 = vmatprep.subr.bf16.mxu0 0
      %552 = vmatpush1.bf16.msra.mxu0 %v471
      %553 = vmatprep.subr.bf16.mxu0 0
      %554 = vmatpush1.bf16.msra.mxu0 %v472
      %555 = vmatprep.subr.bf16.mxu0 0
      %556 = vmatpush1.bf16.msra.mxu0 %v473
      %557 = vmatprep.subr.bf16.mxu0 0
      %558 = vmatpush1.bf16.msra.mxu0 %v474
      %559 = vmatprep.subr.bf16.mxu0 0
      %560 = vmatpush1.bf16.msra.mxu0 %v539
      %561 = vmatprep.subr.bf16.mxu0 0
      %562 = vmatpush1.bf16.msra.mxu0 0
      %563 = vmatprep.subr.bf16.mxu0 0
      %564 = vmatpush1.bf16.msra.mxu0 0
      %565 = vmatprep.subr.bf16.mxu0 0
      %566 = vmatpush1.bf16.msra.mxu0 0
      %567 = vmatprep.subr.bf16.mxu0 0
      %568 = vmatpush1.bf16.msra.mxu0 0
      %569 = vmatprep.subr.bf16.mxu0 0
      %570 = vmatpush1.bf16.msra.mxu0 0
      %571 = vmatprep.subr.bf16.mxu0 0
      %572 = vmatpush1.bf16.msra.mxu0 0
      %573 = vmatprep.mubr.bf16.mxu0 %v487
      %574 = vmatmul.mubr.bf16.gmra.mrb[0].mxu0 %v380
      %v575 = vpop.f32.mrb[0].mxu0
      %v576 = vadd.f32 %v282, %v575
      %v577 = vpop.f32.mrb[0].mxu0
      %v578 = vpop.f32.mrb[0].mxu0
      %v579 = vadd.f32 %v282, %v578
      %v580 = vpop.f32.mrb[0].mxu0
      %581 = vmatprep.mubr.bf16.mxu0 %v490
      %582 = vmatmul.mubr.bf16.gmra.mrb[0].mxu0 %v382
      %v583 = vpop.f32.mrb[0].mxu0
      %v584 = vadd.f32 %v282, %v583
      %v585 = vpop.f32.mrb[0].mxu0
      %v586 = vpop.f32.mrb[0].mxu0
      %v587 = vadd.f32 %v282, %v586
      %v588 = vpop.f32.mrb[0].mxu0
      %589 = vmatprep.mubr.bf16.mxu0 %v493
      %590 = vmatmul.mubr.bf16.gmra.mrb[0].mxu0 %v384
      %v591 = vpop.f32.mrb[0].mxu0
      %v592 = vadd.f32 %v282, %v591
      %v593 = vpop.f32.mrb[0].mxu0
      %v594 = vpop.f32.mrb[0].mxu0
      %v595 = vadd.f32 %v282, %v594
      %v596 = vpop.f32.mrb[0].mxu0
      %597 = vmatprep.mubr.bf16.mxu0 %v496
      %598 = vmatmul.mubr.bf16.gmra.mrb[0].mxu0 %v386
      %v599 = vpop.f32.mrb[0].mxu0
      %v600 = vadd.f32 %v282, %v599
      %v601 = vpop.f32.mrb[0].mxu0
      %v602 = vpop.f32.mrb[0].mxu0
      %v603 = vadd.f32 %v282, %v602
      %v604 = vpop.f32.mrb[0].mxu0
      %605 = vmatprep.mubr.bf16.mxu0 %v499
      %606 = vmatmul.mubr.bf16.gmra.mrb[0].mxu0 %v388
      %v607 = vpop.f32.mrb[0].mxu0
      %v608 = vadd.f32 %v282, %v607
      %v609 = vpop.f32.mrb[0].mxu0
      %v610 = vpop.f32.mrb[0].mxu0
      %v611 = vadd.f32 %v282, %v610
      %v612 = vpop.f32.mrb[0].mxu0
      %613 = vmatprep.mubr.bf16.mxu0 %v502
      %614 = vmatmul.mubr.bf16.gmra.mrb[0].mxu0 %v390
      %v615 = vpop.f32.mrb[0].mxu0
      %v616 = vadd.f32 %v282, %v615
      %v617 = vpop.f32.mrb[0].mxu0
      %v618 = vpop.f32.mrb[0].mxu0
      %v619 = vadd.f32 %v282, %v618
      %v620 = vpop.f32.mrb[0].mxu0
      %621 = vmatprep.mubr.bf16.mxu0 %v505
      %622 = vmatmul.mubr.bf16.gmra.mrb[0].mxu0 %v392
      %v623 = vpop.f32.mrb[0].mxu0
      %v624 = vadd.f32 %v282, %v623
      %v625 = vpop.f32.mrb[0].mxu0
      %v626 = vpop.f32.mrb[0].mxu0
      %v627 = vadd.f32 %v282, %v626
      %v628 = vpop.f32.mrb[0].mxu0
      %629 = vmatprep.mubr.bf16.mxu0 %v508
      %630 = vmatmul.mubr.bf16.gmra.mrb[0].mxu0 %v394
      %v631 = vpop.f32.mrb[0].mxu0
      %v632 = vadd.f32 %v282, %v631
      %v633 = vpop.f32.mrb[0].mxu0
      %v634 = vpop.f32.mrb[0].mxu0
      %v635 = vadd.f32 %v282, %v634
      %v636 = vpop.f32.mrb[0].mxu0
      %637 = vmatprep.mubr.bf16.mxu0 %v511
      %638 = vmatmul.mubr.bf16.gmra.mrb[0].mxu0 %v396
      %v639 = vpop.f32.mrb[0].mxu0
      %v640 = vadd.f32 %v282, %v639
      %v641 = vpop.f32.mrb[0].mxu0
      %v642 = vpop.f32.mrb[0].mxu0
      %v643 = vadd.f32 %v282, %v642
      %v644 = vpop.f32.mrb[0].mxu0
      %645 = vmatprep.mubr.bf16.mxu0 %v514
      %646 = vmatmul.mubr.bf16.gmra.mrb[0].mxu0 %v398
      %v647 = vpop.f32.mrb[0].mxu0
      %v648 = vadd.f32 %v282, %v647
      %v649 = vpop.f32.mrb[0].mxu0
      %v650 = vpop.f32.mrb[0].mxu0
      %v651 = vadd.f32 %v282, %v650
      %v652 = vpop.f32.mrb[0].mxu0
      %653 = vmatprep.mubr.bf16.mxu0 %v517
      %654 = vmatmul.mubr.bf16.gmra.mrb[0].mxu0 %v400
      %v655 = vpop.f32.mrb[0].mxu0
      %v656 = vadd.f32 %v282, %v655
      %v657 = vpop.f32.mrb[0].mxu0
      %v658 = vpop.f32.mrb[0].mxu0
      %v659 = vadd.f32 %v282, %v658
      %v660 = vpop.f32.mrb[0].mxu0
      %661 = vmatprep.mubr.bf16.mxu0 %v520
      %662 = vmatmul.mubr.bf16.gmra.mrb[0].mxu0 %v402
      %v663 = vpop.f32.mrb[0].mxu0
      %v664 = vadd.f32 %v282, %v663
      %v665 = vpop.f32.mrb[0].mxu0
      %v666 = vpop.f32.mrb[0].mxu0
      %v667 = vadd.f32 %v282, %v666
      %v668 = vpop.f32.mrb[0].mxu0
      %669 = vmatprep.mubr.bf16.mxu0 %v523
      %670 = vmatmul.mubr.bf16.gmra.mrb[0].mxu0 %v404
      %v671 = vpop.f32.mrb[0].mxu0
      %v672 = vadd.f32 %v282, %v671
      %v673 = vpop.f32.mrb[0].mxu0
      %v674 = vpop.f32.mrb[0].mxu0
      %v675 = vadd.f32 %v282, %v674
      %v676 = vpop.f32.mrb[0].mxu0
      %677 = vmatprep.mubr.bf16.mxu0 %v526
      %678 = vmatmul.mubr.bf16.gmra.mrb[0].mxu0 %v406
      %v679 = vpop.f32.mrb[0].mxu0
      %v680 = vadd.f32 %v282, %v679
      %v681 = vpop.f32.mrb[0].mxu0
      %v682 = vpop.f32.mrb[0].mxu0
      %v683 = vadd.f32 %v282, %v682
      %v684 = vpop.f32.mrb[0].mxu0
      %685 = vmatprep.mubr.bf16.mxu0 %v529
      %686 = vmatmul.mubr.bf16.gmra.mrb[0].mxu0 %v408
      %v687 = vpop.f32.mrb[0].mxu0
      %v688 = vadd.f32 %v282, %v687
      %v689 = vpop.f32.mrb[0].mxu0
      %v690 = vpop.f32.mrb[0].mxu0
      %v691 = vadd.f32 %v282, %v690
      %v692 = vpop.f32.mrb[0].mxu0
      %693 = vmatprep.mubr.bf16.mxu0 %v532
      %694 = vmatmul.mubr.bf16.gmra.mrb[0].mxu0 %v410
      %v695 = vpop.f32.mrb[0].mxu0
      %v696 = vadd.f32 %v282, %v695
      %v697 = vpop.f32.mrb[0].mxu0
      %v698 = vpop.f32.mrb[0].mxu0
      %v699 = vadd.f32 %v282, %v698
      %v700 = vpop.f32.mrb[0].mxu0
      %701 = vdwg.mxu0
      %v702 = vmax.f32 %v576, 0.0
      %v703 = vmax.f32 %v579, 0.0
      %v704 = vmax.f32 %v584, 0.0
      %v705 = vmax.f32 %v587, 0.0
      %v706 = vmax.f32 %v592, 0.0
      %v707 = vmax.f32 %v595, 0.0
      %v708 = vmax.f32 %v600, 0.0
      %v709 = vmax.f32 %v603, 0.0
      %v710 = vmax.f32 %v608, 0.0
      %v711 = vmax.f32 %v611, 0.0
      %v712 = vmax.f32 %v616, 0.0
      %v713 = vmax.f32 %v619, 0.0
      %v714 = vmax.f32 %v624, 0.0
      %v715 = vmax.f32 %v627, 0.0
      %v716 = vmax.f32 %v632, 0.0
      %v717 = vmax.f32 %v635, 0.0
      %v718 = vmax.f32 %v640, 0.0
      %v719 = vmax.f32 %v643, 0.0
      %v720 = vmax.f32 %v648, 0.0
      %v721 = vmax.f32 %v651, 0.0
      %v722 = vmax.f32 %v656, 0.0
      %v723 = vmax.f32 %v659, 0.0
      %v724 = vmax.f32 %v664, 0.0
      %v725 = vmax.f32 %v667, 0.0
      %v726 = vmax.f32 %v672, 0.0
      %v727 = vmax.f32 %v675, 0.0
      %v728 = vmax.f32 %v680, 0.0
      %v729 = vmax.f32 %v683, 0.0
      %v730 = vmax.f32 %v688, 0.0
      %v731 = vmax.f32 %v691, 0.0
      %v732 = vmax.f32 %v696, 0.0
      %v733 = vmax.f32 %v699, 0.0
      %s734 = scalar_lea.vmem [#allocation2], 24
      %735 = vst [vmem:[%s734 + $0x1] sm:$0xff] %v702
      %736 = vst [vmem:[%s734 + $0x9] sm:$0xff] %v703
      %737 = vst [vmem:[%s734 + $0x19] sm:$0xff] %v704
      %738 = vst [vmem:[%s734 + $0x21] sm:$0xff] %v705
      %739 = vst [vmem:[%s734 + $0x31] sm:$0xff] %v706
      %740 = vst [vmem:[%s734 + $0x39] sm:$0xff] %v707
      %741 = vst [vmem:[%s734 + $0x49] sm:$0xff] %v708
      %742 = vst [vmem:[%s734 + $0x51] sm:$0xff] %v709
      %743 = vst [vmem:[%s734 + $0x61] sm:$0xff] %v710
      %744 = vst [vmem:[%s734 + $0x69] sm:$0xff] %v711
      %745 = vst [vmem:[%s734 + $0x79] sm:$0xff] %v712
      %746 = vst [vmem:[%s734 + $0x81] sm:$0xff] %v713
      %747 = vst [vmem:[%s734 + $0x91] sm:$0xff] %v714
      %748 = vst [vmem:[%s734 + $0x99] sm:$0xff] %v715
      %749 = vst [vmem:[%s734 + $0xa9] sm:$0xff] %v716
      %750 = vst [vmem:[%s734 + $0xb1] sm:$0xff] %v717
      %751 = vst [vmem:[%s734 + $0xc1] sm:$0xff] %v718
      %752 = vst [vmem:[%s734 + $0xc9] sm:$0xff] %v719
      %753 = vst [vmem:[%s734 + $0xd9] sm:$0xff] %v720
      %754 = vst [vmem:[%s734 + $0xe1] sm:$0xff] %v721
      %755 = vst [vmem:[%s734 + $0xf1] sm:$0xff] %v722
      %756 = vst [vmem:[%s734 + $0xf9] sm:$0xff] %v723
      %757 = vst [vmem:[%s734 + $0x109] sm:$0xff] %v724
      %758 = vst [vmem:[%s734 + $0x111] sm:$0xff] %v725
      %759 = vst [vmem:[%s734 + $0x121] sm:$0xff] %v726
      %760 = vst [vmem:[%s734 + $0x129] sm:$0xff] %v727
      %761 = vst [vmem:[%s734 + $0x139] sm:$0xff] %v728
      %762 = vst [vmem:[%s734 + $0x141] sm:$0xff] %v729
      %763 = vst [vmem:[%s734 + $0x151] sm:$0xff] %v730
      %764 = vst [vmem:[%s734 + $0x159] sm:$0xff] %v731
      %765 = vst [vmem:[%s734 + $0x169] sm:$0xff] %v732
      %766 = vst [vmem:[%s734 + $0x171] sm:$0xff] %v733
      %v767 = vld [vmem:[#allocation2] ss:$2 sm:$0xff]
      %s768 = scalar_lea.vmem [#allocation2], 48
      %v769 = vld [vmem:[%s768] ss:$2 sm:$0xff]
      %s770 = scalar_lea.vmem [#allocation2], 96
      %v771 = vld [vmem:[%s770] ss:$2 sm:$0xff]
      %s772 = scalar_lea.vmem [#allocation2], 144
      %v773 = vld [vmem:[%s772] ss:$2 sm:$0xff]
      %s774 = scalar_lea.vmem [#allocation2], 192
      %v775 = vld [vmem:[%s774] ss:$2 sm:$0xff]
      %s776 = scalar_lea.vmem [#allocation2], 240
      %v777 = vld [vmem:[%s776] ss:$2 sm:$0xff]
      %s778 = scalar_lea.vmem [#allocation2], 288
      %v779 = vld [vmem:[%s778] ss:$2 sm:$0xff]
      %s780 = scalar_lea.vmem [#allocation2], 336
      %v781 = vld [vmem:[%s780] ss:$2 sm:$0xff]
      %s782 = scalar_lea.vmem [#allocation2], 1
      %v783 = vld [vmem:[%s782] ss:$2 sm:$0xff]
      %s784 = scalar_lea.vmem [#allocation2], 49
      %v785 = vld [vmem:[%s784] ss:$2 sm:$0xff]
      %s786 = scalar_lea.vmem [#allocation2], 97
      %v787 = vld [vmem:[%s786] ss:$2 sm:$0xff]
      %s788 = scalar_lea.vmem [#allocation2], 145
      %v789 = vld [vmem:[%s788] ss:$2 sm:$0xff]
      %s790 = scalar_lea.vmem [#allocation2], 193
      %v791 = vld [vmem:[%s790] ss:$2 sm:$0xff]
      %s792 = scalar_lea.vmem [#allocation2], 241
      %v793 = vld [vmem:[%s792] ss:$2 sm:$0xff]
      %s794 = scalar_lea.vmem [#allocation2], 289
      %v795 = vld [vmem:[%s794] ss:$2 sm:$0xff]
      %s796 = scalar_lea.vmem [#allocation2], 337
      %v797 = vld [vmem:[%s796] ss:$2 sm:$0xff]
      %v798 = vmax.f32 %v767, %v783
      %v799 = vmax.f32 %v769, %v785
      %v800 = vmax.f32 %v771, %v787
      %v801 = vmax.f32 %v773, %v789
      %v802 = vmax.f32 %v775, %v791
      %v803 = vmax.f32 %v777, %v793
      %v804 = vmax.f32 %v779, %v795
      %v805 = vmax.f32 %v781, %v797
      %s806 = scalar_lea.vmem [#allocation2], 2
      %v807 = vld [vmem:[%s806] ss:$2 sm:$0xff]
      %s808 = scalar_lea.vmem [#allocation2], 50
      %v809 = vld [vmem:[%s808] ss:$2 sm:$0xff]
      %s810 = scalar_lea.vmem [#allocation2], 98
      %v811 = vld [vmem:[%s810] ss:$2 sm:$0xff]
      %s812 = scalar_lea.vmem [#allocation2], 146
      %v813 = vld [vmem:[%s812] ss:$2 sm:$0xff]
      %s814 = scalar_lea.vmem [#allocation2], 194
      %v815 = vld [vmem:[%s814] ss:$2 sm:$0xff]
      %s816 = scalar_lea.vmem [#allocation2], 242
      %v817 = vld [vmem:[%s816] ss:$2 sm:$0xff]
      %s818 = scalar_lea.vmem [#allocation2], 290
      %v819 = vld [vmem:[%s818] ss:$2 sm:$0xff]
      %s820 = scalar_lea.vmem [#allocation2], 338
      %v821 = vld [vmem:[%s820] ss:$2 sm:$0xff]
      %v822 = vmax.f32 %v798, %v807
      %v823 = vmax.f32 %v799, %v809
      %v824 = vmax.f32 %v800, %v811
      %v825 = vmax.f32 %v801, %v813
      %v826 = vmax.f32 %v802, %v815
      %v827 = vmax.f32 %v803, %v817
      %v828 = vmax.f32 %v804, %v819
      %v829 = vmax.f32 %v805, %v821
      %v830 = vld [vmem:[%s734] ss:$2 sm:$0xff]
      %s831 = scalar_lea.vmem %s734, 48 [#allocation2]
      %v832 = vld [vmem:[%s831] ss:$2 sm:$0xff]
      %s833 = scalar_lea.vmem %s734, 96 [#allocation2]
      %v834 = vld [vmem:[%s833] ss:$2 sm:$0xff]
      %s835 = scalar_lea.vmem %s734, 144 [#allocation2]
      %v836 = vld [vmem:[%s835] ss:$2 sm:$0xff]
      %s837 = scalar_lea.vmem %s734, 192 [#allocation2]
      %v838 = vld [vmem:[%s837] ss:$2 sm:$0xff]
      %s839 = scalar_lea.vmem %s734, 240 [#allocation2]
      %v840 = vld [vmem:[%s839] ss:$2 sm:$0xff]
      %s841 = scalar_lea.vmem %s734, 288 [#allocation2]
      %v842 = vld [vmem:[%s841] ss:$2 sm:$0xff]
      %s843 = scalar_lea.vmem %s734, 336 [#allocation2]
      %v844 = vld [vmem:[%s843] ss:$2 sm:$0xff]
      %v845 = vmax.f32 %v822, %v830
      %v846 = vmax.f32 %v823, %v832
      %v847 = vmax.f32 %v824, %v834
      %v848 = vmax.f32 %v825, %v836
      %v849 = vmax.f32 %v826, %v838
      %v850 = vmax.f32 %v827, %v840
      %v851 = vmax.f32 %v828, %v842
      %v852 = vmax.f32 %v829, %v844
      %s853 = scalar_lea.vmem %s734, 1 [#allocation2]
      %v854 = vld [vmem:[%s853] ss:$2 sm:$0xff]
      %s855 = scalar_lea.vmem %s734, 49 [#allocation2]
      %v856 = vld [vmem:[%s855] ss:$2 sm:$0xff]
      %s857 = scalar_lea.vmem %s734, 97 [#allocation2]
      %v858 = vld [vmem:[%s857] ss:$2 sm:$0xff]
      %s859 = scalar_lea.vmem %s734, 145 [#allocation2]
      %v860 = vld [vmem:[%s859] ss:$2 sm:$0xff]
      %s861 = scalar_lea.vmem %s734, 193 [#allocation2]
      %v862 = vld [vmem:[%s861] ss:$2 sm:$0xff]
      %s863 = scalar_lea.vmem %s734, 241 [#allocation2]
      %v864 = vld [vmem:[%s863] ss:$2 sm:$0xff]
      %s865 = scalar_lea.vmem %s734, 289 [#allocation2]
      %v866 = vld [vmem:[%s865] ss:$2 sm:$0xff]
      %s867 = scalar_lea.vmem %s734, 337 [#allocation2]
      %v868 = vld [vmem:[%s867] ss:$2 sm:$0xff]
      %v869 = vmax.f32 %v845, %v854
      %v870 = vmax.f32 %v846, %v856
      %v871 = vmax.f32 %v847, %v858
      %v872 = vmax.f32 %v848, %v860
      %v873 = vmax.f32 %v849, %v862
      %v874 = vmax.f32 %v850, %v864
      %v875 = vmax.f32 %v851, %v866
      %v876 = vmax.f32 %v852, %v868
      %s877 = scalar_lea.vmem %s734, 2 [#allocation2]
      %v878 = vld [vmem:[%s877] ss:$2 sm:$0xff]
      %s879 = scalar_lea.vmem %s734, 50 [#allocation2]
      %v880 = vld [vmem:[%s879] ss:$2 sm:$0xff]
      %s881 = scalar_lea.vmem %s734, 98 [#allocation2]
      %v882 = vld [vmem:[%s881] ss:$2 sm:$0xff]
      %s883 = scalar_lea.vmem %s734, 146 [#allocation2]
      %v884 = vld [vmem:[%s883] ss:$2 sm:$0xff]
      %s885 = scalar_lea.vmem %s734, 194 [#allocation2]
      %v886 = vld [vmem:[%s885] ss:$2 sm:$0xff]
      %s887 = scalar_lea.vmem %s734, 242 [#allocation2]
      %v888 = vld [vmem:[%s887] ss:$2 sm:$0xff]
      %s889 = scalar_lea.vmem %s734, 290 [#allocation2]
      %v890 = vld [vmem:[%s889] ss:$2 sm:$0xff]
      %s891 = scalar_lea.vmem %s734, 338 [#allocation2]
      %v892 = vld [vmem:[%s891] ss:$2 sm:$0xff]
      %v893 = vmax.f32 %v869, %v878
      %v894 = vmax.f32 %v870, %v880
      %v895 = vmax.f32 %v871, %v882
      %v896 = vmax.f32 %v872, %v884
      %v897 = vmax.f32 %v873, %v886
      %v898 = vmax.f32 %v874, %v888
      %v899 = vmax.f32 %v875, %v890
      %v900 = vmax.f32 %v876, %v892
      %s901 = scalar_lea.vmem [#allocation2], 48
      %v902 = vld [vmem:[%s901] ss:$2 sm:$0xff]
      %s903 = scalar_lea.vmem %s901, 48 [#allocation2]
      %v904 = vld [vmem:[%s903] ss:$2 sm:$0xff]
      %s905 = scalar_lea.vmem %s901, 96 [#allocation2]
      %v906 = vld [vmem:[%s905] ss:$2 sm:$0xff]
      %s907 = scalar_lea.vmem %s901, 144 [#allocation2]
      %v908 = vld [vmem:[%s907] ss:$2 sm:$0xff]
      %s909 = scalar_lea.vmem %s901, 192 [#allocation2]
      %v910 = vld [vmem:[%s909] ss:$2 sm:$0xff]
      %s911 = scalar_lea.vmem %s901, 240 [#allocation2]
      %v912 = vld [vmem:[%s911] ss:$2 sm:$0xff]
      %s913 = scalar_lea.vmem %s901, 288 [#allocation2]
      %v914 = vld [vmem:[%s913] ss:$2 sm:$0xff]
      %s915 = scalar_lea.vmem %s901, 336 [#allocation2]
      %v916 = vld [vmem:[%s915] ss:$2 sm:$0xff]
      %v917 = vmax.f32 %v893, %v902
      %v918 = vmax.f32 %v894, %v904
      %v919 = vmax.f32 %v895, %v906
      %v920 = vmax.f32 %v896, %v908
      %v921 = vmax.f32 %v897, %v910
      %v922 = vmax.f32 %v898, %v912
      %v923 = vmax.f32 %v899, %v914
      %v924 = vmax.f32 %v900, %v916
      %s925 = scalar_lea.vmem %s901, 1 [#allocation2]
      %v926 = vld [vmem:[%s925] ss:$2 sm:$0xff]
      %s927 = scalar_lea.vmem %s901, 49 [#allocation2]
      %v928 = vld [vmem:[%s927] ss:$2 sm:$0xff]
      %s929 = scalar_lea.vmem %s901, 97 [#allocation2]
      %v930 = vld [vmem:[%s929] ss:$2 sm:$0xff]
      %s931 = scalar_lea.vmem %s901, 145 [#allocation2]
      %v932 = vld [vmem:[%s931] ss:$2 sm:$0xff]
      %s933 = scalar_lea.vmem %s901, 193 [#allocation2]
      %v934 = vld [vmem:[%s933] ss:$2 sm:$0xff]
      %s935 = scalar_lea.vmem %s901, 241 [#allocation2]
      %v936 = vld [vmem:[%s935] ss:$2 sm:$0xff]
      %s937 = scalar_lea.vmem %s901, 289 [#allocation2]
      %v938 = vld [vmem:[%s937] ss:$2 sm:$0xff]
      %s939 = scalar_lea.vmem %s901, 337 [#allocation2]
      %v940 = vld [vmem:[%s939] ss:$2 sm:$0xff]
      %v941 = vmax.f32 %v917, %v926
      %v942 = vmax.f32 %v918, %v928
      %v943 = vmax.f32 %v919, %v930
      %v944 = vmax.f32 %v920, %v932
      %v945 = vmax.f32 %v921, %v934
      %v946 = vmax.f32 %v922, %v936
      %v947 = vmax.f32 %v923, %v938
      %v948 = vmax.f32 %v924, %v940
      %s949 = scalar_lea.vmem %s901, 2 [#allocation2]
      %v950 = vld [vmem:[%s949] ss:$2 sm:$0xff]
      %s951 = scalar_lea.vmem %s901, 50 [#allocation2]
      %v952 = vld [vmem:[%s951] ss:$2 sm:$0xff]
      %s953 = scalar_lea.vmem %s901, 98 [#allocation2]
      %v954 = vld [vmem:[%s953] ss:$2 sm:$0xff]
      %s955 = scalar_lea.vmem %s901, 146 [#allocation2]
      %v956 = vld [vmem:[%s955] ss:$2 sm:$0xff]
      %s957 = scalar_lea.vmem %s901, 194 [#allocation2]
      %v958 = vld [vmem:[%s957] ss:$2 sm:$0xff]
      %s959 = scalar_lea.vmem %s901, 242 [#allocation2]
      %v960 = vld [vmem:[%s959] ss:$2 sm:$0xff]
      %s961 = scalar_lea.vmem %s901, 290 [#allocation2]
      %v962 = vld [vmem:[%s961] ss:$2 sm:$0xff]
      %s963 = scalar_lea.vmem %s901, 338 [#allocation2]
      %v964 = vld [vmem:[%s963] ss:$2 sm:$0xff]
      %v965 = vmax.f32 %v941, %v950
      %v966 = vmax.f32 %v942, %v952
      %v967 = vmax.f32 %v943, %v954
      %v968 = vmax.f32 %v944, %v956
      %v969 = vmax.f32 %v945, %v958
      %v970 = vmax.f32 %v946, %v960
      %v971 = vmax.f32 %v947, %v962
      %v972 = vmax.f32 %v948, %v964
      %973 = vst [vmem:[%s170] sm:$0xff] %v965
      %974 = vst [vmem:[%s170 + $0x8] sm:$0xff] %v966
      %975 = vst [vmem:[%s170 + $0x10] sm:$0xff] %v967
      %976 = vst [vmem:[%s170 + $0x18] sm:$0xff] %v968
      %977 = vst [vmem:[%s170 + $0x20] sm:$0xff] %v969
      %978 = vst [vmem:[%s170 + $0x28] sm:$0xff] %v970
      %979 = vst [vmem:[%s170 + $0x30] sm:$0xff] %v971
      %980 = vst [vmem:[%s170 + $0x38] sm:$0xff] %v972
      %p981 = scmp.lt.s32.totalorder %s14, 1
      %s982 = scalar_select %p981, %s14, 1
      %s983 = smul.addr %s982, 8
      %s984 = smul.addr %s983, 8
      %s985 = scalar_lea.vmem %s3, %s984
      // Predicated region
      $region33: #{input_block_forward.1} parent=31 // pred_check
        %p986 = pneg %p100
      $region34: #{input_block_forward.1} parent=31 // pred_check_branch
        %988 = sbr.rel (%p986) target = $region36
      $region35: #{input_block_forward.1} parent=31 // pred_region
        _
      $region36: #{input_block_forward.1} parent=31 // pred_fallthru
        _
    $region32: #{input_block_forward.1} parent=5 // pred_fallthru
      _
    %p989 = scmp.le.s32.totalorder 2, %s9
    // Predicated region
    $region37: #{input_block_forward.1} parent=5 // pred_check
      %p990 = pneg %p989
    $region38: #{input_block_forward.1} parent=5 // pred_check_branch
      %992 = sbr.rel (%p990) target = $region40
    $region39: #{input_block_forward.1} parent=5 // pred_region
      %s993 = ssub.s32 %s9, 2
      // Predicated region
      $region41: #{input_block_forward.1} parent=39 // pred_check
        %p994 = pneg %p106
      $region42: #{input_block_forward.1} parent=39 // pred_check_branch
        %996 = sbr.rel (%p994) target = $region44
      $region43: #{input_block_forward.1} parent=39 // pred_region
        %p997 = scmp.lt.s32.totalorder %s15, 1
        %s998 = scalar_select %p997, %s15, 1
        %s999 = smul.addr %s998, 8
        %s1000 = smul.addr %s999, 8
        %s1001 = scalar_lea.vmem %s3, %s1000
      $region44: #{input_block_forward.1} parent=39 // pred_fallthru
        _
    $region40: #{input_block_forward.1} parent=5 // pred_fallthru
      _
  $region6: #{input_block_forward.1} parent=0 // loop_footer
    %s13 = sadd.s32 1, %s9
  $region7: #{input_block_forward.1} parent=0 // loop_footer_branch
    %8 = sbr.rel target = $region3
  $region8: #{input_block_forward.1} parent=0 // loop_exit
    _

</llo_original>
